<compile_context>
chip_gen: v7x
topology: tpu7x:2x2x1
jax: 0.10.0
libtpu: 0.0.40
codegen_flags: <defaults>
</compile_context>

<pallas_src>
import functools
import math

import jax
import jax.numpy as jnp
from jax.experimental import pallas as pl
from jax.experimental.pallas import tpu as pltpu


def _round_up(v, m):
    return -(-v // m) * m


def _choose_tile_len(L, C, pad, itemsize, target_bytes):
    """Tile length TL (time steps) such that W = TL*C is a multiple of 128
    lanes, TL >= 2*pad (so each tile has a genuine interior), and the flat
    tile stays near `target_bytes`.  TL no longer has to divide L."""
    q = 128 // math.gcd(128, C)              # smallest TL making (TL*C) % 128 == 0
    min_tl = _round_up(max(q, 2 * pad), q)
    budget_tl = (max(1, target_bytes // (C * itemsize)) // q) * q
    full_tl = _round_up(L, q)                # one tile covering the whole series
    return max(min_tl, min(budget_tl, full_tl))


def _decomp_kernel(hf_ref, xc_ref, hb_ref, res_ref, mean_ref,
                   fwin_ref, bwin_ref, *, kernel_size, chan, width):
    """One (batch, L-tile) grid step.

    hf_ref / hb_ref : (1,1,1,HC) replicate-clamped halo rows (front / back).
    xc_ref          : (1,1,1,W)  the tile, flat time*channel (W % 128 == 0).
    fwin/bwin_ref   : tiny scratch windows (3*HC) used only for the boundary
                      outputs that need halo data.
    """
    k = kernel_size
    pad = (k - 1) // 2
    HC = pad * chan
    W = width
    inv_k = 1.0 / float(k)
    f32 = jnp.float32
    out_dtype = res_ref.dtype

    # ---- boundary strips (2*HC outputs, tiny): splice halos + tile edges
    # into small scratch windows, then windowed-sum over them. ----
    fwin_ref[:, :, :, 0:HC] = hf_ref[...]
    fwin_ref[:, :, :, HC:3 * HC] = xc_ref[:, :, :, 0:2 * HC]
    bwin_ref[:, :, :, 0:2 * HC] = xc_ref[:, :, :, W - 2 * HC:W]
    bwin_ref[:, :, :, 2 * HC:3 * HC] = hb_ref[...]

    def _edge(win_ref, out_lo):
        acc = win_ref[:, :, :, 0:HC].astype(f32)
        for j in range(1, k):
            acc = acc + win_ref[:, :, :, j * chan:j * chan + HC].astype(f32)
        mean = acc * inv_k
        x_e = win_ref[:, :, :, HC:2 * HC].astype(f32)
        mean_ref[:, :, :, out_lo:out_lo + HC] = mean.astype(out_dtype)
        res_ref[:, :, :, out_lo:out_lo + HC] = (x_e - mean).astype(out_dtype)

    _edge(fwin_ref, 0)            # outputs [0, HC)
    _edge(bwin_ref, W - HC)       # outputs [W-HC, W)

    # ---- interior (bulk of the tile): shifted slices read straight from the
    # input block -- no staging copy.  Chunked so live vregs stay bounded
    # (~3 values of CHUNK elems); stores are large lane-dense slabs. ----
    CHUNK = 8192
    for start in range(HC, W - HC, CHUNK):
        size = min(CHUNK, (W - HC) - start)
        base = start - HC
        x_c = None
        acc = xc_ref[:, :, :, base:base + size].astype(f32)          # j = 0
        for j in range(1, k):
            o = base + j * chan
            v = xc_ref[:, :, :, o:o + size]
            if j == pad:                       # centred term == x[start:start+size]
                x_c = v
            acc = acc + v.astype(f32)
        mean = acc * inv_k
        mean_ref[:, :, :, start:start + size] = mean.astype(out_dtype)
        res_ref[:, :, :, start:start + size] = (x_c.astype(f32) - mean).astype(out_dtype)


def series_decomp(x, kernel_size, *, tile_target_bytes=1024 * 1024):
    """Returns (res, moving_mean), matching PyTorch series_decomp.forward."""
    assert kernel_size >= 1 and kernel_size % 2 == 1, "kernel_size must be odd"
    B, L, C = x.shape
    pad = (kernel_size - 1) // 2
    if pad == 0:                               # window of 1: moving average = identity
        return jnp.zeros_like(x), x

    itemsize = jnp.dtype(x.dtype).itemsize
    TL = _choose_tile_len(L, C, pad, itemsize, tile_target_bytes)
    T = -(-L // TL)
    Lp = T * TL
    W = TL * C                                  # flat tile width, multiple of 128
    HC = pad * C

    # Edge-pad the time axis only when L is not a multiple of TL.  The padded
    # rows replicate x[:, L-1], so halos clipped against Lp still implement the
    # exact replicate padding of the original series; padded outputs are
    # sliced off at the end.
    xp = x if Lp == L else jnp.pad(x, ((0, 0), (0, Lp - L), (0, 0)), mode="edge")

    # Tiny per-tile halos (replicate-clamped edge rows), built in plain JAX;
    # no full padded copy of x is materialized for the kernel inputs.
    starts = jnp.arange(T) * TL
    f_idx = jnp.clip(starts[:, None] + jnp.arange(-pad, 0)[None, :], 0, Lp - 1)
    b_idx = jnp.clip(starts[:, None] + TL + jnp.arange(pad)[None, :], 0, Lp - 1)
    halo_f = xp[:, f_idx, :].reshape(B, T, 1, HC)
    halo_b = xp[:, b_idx, :].reshape(B, T, 1, HC)

    # Lane-dense flat view: contiguous reshape, no extra HBM copy.
    x4 = xp.reshape(B, T, 1, W)

    kernel = functools.partial(_decomp_kernel, kernel_size=kernel_size,
                               chan=C, width=W)

    wbytes = W * itemsize
    # ~6x tile (double-buffered in + 2 double-buffered outs) + slack.
    vmem_limit = int(min(64 * 2**20, max(32 * 2**20, 8 * wbytes)))

    res4, mean4 = pl.pallas_call(
        kernel,
        out_shape=(
            jax.ShapeDtypeStruct((B, T, 1, W), x.dtype),
            jax.ShapeDtypeStruct((B, T, 1, W), x.dtype),
        ),
        grid=(B, T),
        in_specs=[
            pl.BlockSpec((1, 1, 1, HC), lambda b, t: (b, t, 0, 0)),
            pl.BlockSpec((1, 1, 1, W), lambda b, t: (b, t, 0, 0)),
            pl.BlockSpec((1, 1, 1, HC), lambda b, t: (b, t, 0, 0)),
        ],
        out_specs=(
            pl.BlockSpec((1, 1, 1, W), lambda b, t: (b, t, 0, 0)),
            pl.BlockSpec((1, 1, 1, W), lambda b, t: (b, t, 0, 0)),
        ),
        scratch_shapes=[
            pltpu.VMEM((1, 1, 1, 3 * HC), x.dtype),   # front boundary window
            pltpu.VMEM((1, 1, 1, 3 * HC), x.dtype),   # back boundary window
        ],
        compiler_params=pltpu.CompilerParams(
            dimension_semantics=("parallel", "parallel"),
            vmem_limit_bytes=vmem_limit),
    )(halo_f, x4, halo_b)

    res = res4.reshape(B, Lp, C)[:, :L, :]
    mean = mean4.reshape(B, Lp, C)[:, :L, :]
    return res, mean


def _reference(x, kernel_size):
    # Pure-JAX reference mirroring the PyTorch code exactly.
    pad = (kernel_size - 1) // 2
    front = jnp.repeat(x[:, 0:1, :], pad, axis=1)
    end = jnp.repeat(x[:, -1:, :], pad, axis=1)
    xpad = jnp.concatenate([front, x, end], axis=1)
    L = x.shape[1]
    windows = jnp.stack([xpad[:, j:j + L, :] for j in range(kernel_size)], axis=0)
    mean = jnp.mean(windows, axis=0)
    return x - mean, mean


if __name__ == "__main__":
    decomp = jax.jit(series_decomp, static_argnums=(1,),
                     static_argnames=("tile_target_bytes",))

    # Test 1: typical small case, single L-tile per batch.
    x1 = jax.random.normal(jax.random.PRNGKey(0), (2, 16, 8), dtype=jnp.float32)
    res1, mean1 = decomp(x1, 5)
    jax.block_until_ready((res1, mean1))
    r1, m1 = _reference(x1, 5)
    assert jnp.allclose(res1, r1, atol=1e-5), "residual mismatch (single tile)"
    assert jnp.allclose(mean1, m1, atol=1e-5), "moving_mean mismatch (single tile)"

    # Test 2: several L-tiles + non-divisible L (exercises halo + edge-pad path).
    x2 = jax.random.normal(jax.random.PRNGKey(0), (2, 50, 8), dtype=jnp.float32)
    res2, mean2 = decomp(x2, 5, tile_target_bytes=16 * 8 * 4)
    jax.block_until_ready((res2, mean2))
    r2, m2 = _reference(x2, 5)
    assert jnp.allclose(res2, r2, atol=1e-5), "residual mismatch (tiled)"
    assert jnp.allclose(mean2, m2, atol=1e-5), "moving_mean mismatch (tiled)"

    # Test 3: large window (kernel_size=25) with heavy edge clamping.
    x3 = jax.random.normal(jax.random.PRNGKey(1), (2, 16, 4), dtype=jnp.float32)
    res3, mean3 = decomp(x3, 25)
    jax.block_until_ready((res3, mean3))
    r3, m3 = _reference(x3, 25)
    assert jnp.allclose(res3, r3, atol=1e-5), "residual mismatch (k=25)"
    assert jnp.allclose(mean3, m3, atol=1e-5), "moving_mean mismatch (k=25)"

    # Test 4: channel count with awkward 128-alignment (C=6) and L=20.
    x4 = jax.random.normal(jax.random.PRNGKey(2), (2, 20, 6), dtype=jnp.float32)
    res4, mean4 = decomp(x4, 7)
    jax.block_until_ready((res4, mean4))
    r4, m4 = _reference(x4, 7)
    assert jnp.allclose(res4, r4, atol=1e-5), "residual mismatch (C=6)"
    assert jnp.allclose(mean4, m4, atol=1e-5), "moving_mean mismatch (C=6)"

    print("KERNEL_OK")
</pallas_src>

<mosaic_0001>
module attributes {stable_mosaic.version = 11 : i64} {
  func.func @_decomp_kernel(%arg0: i32, %arg1: i32, %arg2: memref<1x1x1x16xf32, #tpu.memory_space<vmem>>, %arg3: memref<1x1x1x128xf32, #tpu.memory_space<vmem>>, %arg4: memref<1x1x1x16xf32, #tpu.memory_space<vmem>>, %arg5: memref<1x1x1x128xf32, #tpu.memory_space<vmem>>, %arg6: memref<1x1x1x128xf32, #tpu.memory_space<vmem>>, %arg7: memref<1x1x1x48xf32, #tpu.memory_space<vmem>>, %arg8: memref<1x1x1x48xf32, #tpu.memory_space<vmem>>) attributes {dimension_semantics = [#tpu.dimension_semantics<parallel>, #tpu.dimension_semantics<parallel>], iteration_bounds = array<i64: 2, 1>, scalar_prefetch = 0 : i64, scratch_operands = 2 : i64, tpu.core_type = #tpu.core_type<tc>, window_params = [{transform_indices = @transform_0, window_bounds = array<i64: 1, 1, 1, 16>}, {transform_indices = @transform_1, window_bounds = array<i64: 1, 1, 1, 128>}, {transform_indices = @transform_2, window_bounds = array<i64: 1, 1, 1, 16>}, {transform_indices = @transform_3, window_bounds = array<i64: 1, 1, 1, 128>}, {transform_indices = @transform_4, window_bounds = array<i64: 1, 1, 1, 128>}]} {
    %c0 = arith.constant 0 : index
    %c0_0 = arith.constant 0 : index
    %c0_1 = arith.constant 0 : index
    %c0_2 = arith.constant 0 : index
    %0 = vector.load %arg2[%c0, %c0_0, %c0_1, %c0_2] : memref<1x1x1x16xf32, #tpu.memory_space<vmem>>, vector<1x1x1x16xf32>
    %c0_3 = arith.constant 0 : index
    %c0_4 = arith.constant 0 : index
    %c0_5 = arith.constant 0 : index
    %c0_6 = arith.constant 0 : index
    %1 = vector.load %arg7[%c0_3, %c0_4, %c0_5, %c0_6] : memref<1x1x1x48xf32, #tpu.memory_space<vmem>>, vector<1x1x1x16xf32>
    tpu.vector_store %arg7[%c0_3, %c0_4, %c0_5, %c0_6], %0 {strides = array<i32>} : memref<1x1x1x48xf32, #tpu.memory_space<vmem>>, vector<1x1x1x16xf32>,
    %c0_7 = arith.constant 0 : index
    %c0_8 = arith.constant 0 : index
    %c0_9 = arith.constant 0 : index
    %c0_10 = arith.constant 0 : index
    %2 = vector.load %arg3[%c0_7, %c0_8, %c0_9, %c0_10] : memref<1x1x1x128xf32, #tpu.memory_space<vmem>>, vector<1x1x1x32xf32>
    %c0_11 = arith.constant 0 : index
    %c0_12 = arith.constant 0 : index
    %c0_13 = arith.constant 0 : index
    %c16 = arith.constant 16 : index
    %3 = vector.load %arg7[%c0_11, %c0_12, %c0_13, %c16] : memref<1x1x1x48xf32, #tpu.memory_space<vmem>>, vector<1x1x1x32xf32>
    tpu.vector_store %arg7[%c0_11, %c0_12, %c0_13, %c16], %2 {strides = array<i32>} : memref<1x1x1x48xf32, #tpu.memory_space<vmem>>, vector<1x1x1x32xf32>,
    %c0_14 = arith.constant 0 : index
    %c0_15 = arith.constant 0 : index
    %c0_16 = arith.constant 0 : index
    %c96 = arith.constant 96 : index
    %4 = vector.load %arg3[%c0_14, %c0_15, %c0_16, %c96] : memref<1x1x1x128xf32, #tpu.memory_space<vmem>>, vector<1x1x1x32xf32>
    %c0_17 = arith.constant 0 : index
    %c0_18 = arith.constant 0 : index
    %c0_19 = arith.constant 0 : index
    %c0_20 = arith.constant 0 : index
    %5 = vector.load %arg8[%c0_17, %c0_18, %c0_19, %c0_20] : memref<1x1x1x48xf32, #tpu.memory_space<vmem>>, vector<1x1x1x32xf32>
    tpu.vector_store %arg8[%c0_17, %c0_18, %c0_19, %c0_20], %4 {strides = array<i32>} : memref<1x1x1x48xf32, #tpu.memory_space<vmem>>, vector<1x1x1x32xf32>,
    %c0_21 = arith.constant 0 : index
    %c0_22 = arith.constant 0 : index
    %c0_23 = arith.constant 0 : index
    %c0_24 = arith.constant 0 : index
    %6 = vector.load %arg4[%c0_21, %c0_22, %c0_23, %c0_24] : memref<1x1x1x16xf32, #tpu.memory_space<vmem>>, vector<1x1x1x16xf32>
    %c0_25 = arith.constant 0 : index
    %c0_26 = arith.constant 0 : index
    %c0_27 = arith.constant 0 : index
    %c32 = arith.constant 32 : index
    %7 = vector.load %arg8[%c0_25, %c0_26, %c0_27, %c32] : memref<1x1x1x48xf32, #tpu.memory_space<vmem>>, vector<1x1x1x16xf32>
    tpu.vector_store %arg8[%c0_25, %c0_26, %c0_27, %c32], %6 {strides = array<i32>} : memref<1x1x1x48xf32, #tpu.memory_space<vmem>>, vector<1x1x1x16xf32>,
    %c0_28 = arith.constant 0 : index
    %c0_29 = arith.constant 0 : index
    %c0_30 = arith.constant 0 : index
    %c0_31 = arith.constant 0 : index
    %8 = vector.load %arg7[%c0_28, %c0_29, %c0_30, %c0_31] : memref<1x1x1x48xf32, #tpu.memory_space<vmem>>, vector<1x1x1x16xf32>
    %c0_32 = arith.constant 0 : index
    %c0_33 = arith.constant 0 : index
    %c0_34 = arith.constant 0 : index
    %c8 = arith.constant 8 : index
    %9 = vector.load %arg7[%c0_32, %c0_33, %c0_34, %c8] : memref<1x1x1x48xf32, #tpu.memory_space<vmem>>, vector<1x1x1x16xf32>
    %10 = arith.addf %8, %9 : vector<1x1x1x16xf32>
    %c0_35 = arith.constant 0 : index
    %c0_36 = arith.constant 0 : index
    %c0_37 = arith.constant 0 : index
    %c16_38 = arith.constant 16 : index
    %11 = vector.load %arg7[%c0_35, %c0_36, %c0_37, %c16_38] : memref<1x1x1x48xf32, #tpu.memory_space<vmem>>, vector<1x1x1x16xf32>
    %12 = arith.addf %10, %11 : vector<1x1x1x16xf32>
    %c0_39 = arith.constant 0 : index
    %c0_40 = arith.constant 0 : index
    %c0_41 = arith.constant 0 : index
    %c24 = arith.constant 24 : index
    %13 = vector.load %arg7[%c0_39, %c0_40, %c0_41, %c24] : memref<1x1x1x48xf32, #tpu.memory_space<vmem>>, vector<1x1x1x16xf32>
    %14 = arith.addf %12, %13 : vector<1x1x1x16xf32>
    %c0_42 = arith.constant 0 : index
    %c0_43 = arith.constant 0 : index
    %c0_44 = arith.constant 0 : index
    %c32_45 = arith.constant 32 : index
    %15 = vector.load %arg7[%c0_42, %c0_43, %c0_44, %c32_45] : memref<1x1x1x48xf32, #tpu.memory_space<vmem>>, vector<1x1x1x16xf32>
    %16 = arith.addf %14, %15 : vector<1x1x1x16xf32>
    %cst = arith.constant 2.000000e-01 : f32
    %17 = vector.broadcast %cst : f32 to vector<1x1x1x16xf32>
    %18 = arith.mulf %16, %17 : vector<1x1x1x16xf32>
    %c0_46 = arith.constant 0 : index
    %c0_47 = arith.constant 0 : index
    %c0_48 = arith.constant 0 : index
    %c16_49 = arith.constant 16 : index
    %19 = vector.load %arg7[%c0_46, %c0_47, %c0_48, %c16_49] : memref<1x1x1x48xf32, #tpu.memory_space<vmem>>, vector<1x1x1x16xf32>
    %c0_50 = arith.constant 0 : index
    %c0_51 = arith.constant 0 : index
    %c0_52 = arith.constant 0 : index
    %c0_53 = arith.constant 0 : index
    %20 = vector.load %arg6[%c0_50, %c0_51, %c0_52, %c0_53] : memref<1x1x1x128xf32, #tpu.memory_space<vmem>>, vector<1x1x1x16xf32>
    tpu.vector_store %arg6[%c0_50, %c0_51, %c0_52, %c0_53], %18 {strides = array<i32>} : memref<1x1x1x128xf32, #tpu.memory_space<vmem>>, vector<1x1x1x16xf32>,
    %21 = arith.subf %19, %18 : vector<1x1x1x16xf32>
    %c0_54 = arith.constant 0 : index
    %c0_55 = arith.constant 0 : index
    %c0_56 = arith.constant 0 : index
    %c0_57 = arith.constant 0 : index
    %22 = vector.load %arg5[%c0_54, %c0_55, %c0_56, %c0_57] : memref<1x1x1x128xf32, #tpu.memory_space<vmem>>, vector<1x1x1x16xf32>
    tpu.vector_store %arg5[%c0_54, %c0_55, %c0_56, %c0_57], %21 {strides = array<i32>} : memref<1x1x1x128xf32, #tpu.memory_space<vmem>>, vector<1x1x1x16xf32>,
    %c0_58 = arith.constant 0 : index
    %c0_59 = arith.constant 0 : index
    %c0_60 = arith.constant 0 : index
    %c0_61 = arith.constant 0 : index
    %23 = vector.load %arg8[%c0_58, %c0_59, %c0_60, %c0_61] : memref<1x1x1x48xf32, #tpu.memory_space<vmem>>, vector<1x1x1x16xf32>
    %c0_62 = arith.constant 0 : index
    %c0_63 = arith.constant 0 : index
    %c0_64 = arith.constant 0 : index
    %c8_65 = arith.constant 8 : index
    %24 = vector.load %arg8[%c0_62, %c0_63, %c0_64, %c8_65] : memref<1x1x1x48xf32, #tpu.memory_space<vmem>>, vector<1x1x1x16xf32>
    %25 = arith.addf %23, %24 : vector<1x1x1x16xf32>
    %c0_66 = arith.constant 0 : index
    %c0_67 = arith.constant 0 : index
    %c0_68 = arith.constant 0 : index
    %c16_69 = arith.constant 16 : index
    %26 = vector.load %arg8[%c0_66, %c0_67, %c0_68, %c16_69] : memref<1x1x1x48xf32, #tpu.memory_space<vmem>>, vector<1x1x1x16xf32>
    %27 = arith.addf %25, %26 : vector<1x1x1x16xf32>
    %c0_70 = arith.constant 0 : index
    %c0_71 = arith.constant 0 : index
    %c0_72 = arith.constant 0 : index
    %c24_73 = arith.constant 24 : index
    %28 = vector.load %arg8[%c0_70, %c0_71, %c0_72, %c24_73] : memref<1x1x1x48xf32, #tpu.memory_space<vmem>>, vector<1x1x1x16xf32>
    %29 = arith.addf %27, %28 : vector<1x1x1x16xf32>
    %c0_74 = arith.constant 0 : index
    %c0_75 = arith.constant 0 : index
    %c0_76 = arith.constant 0 : index
    %c32_77 = arith.constant 32 : index
    %30 = vector.load %arg8[%c0_74, %c0_75, %c0_76, %c32_77] : memref<1x1x1x48xf32, #tpu.memory_space<vmem>>, vector<1x1x1x16xf32>
    %31 = arith.addf %29, %30 : vector<1x1x1x16xf32>
    %cst_78 = arith.constant 2.000000e-01 : f32
    %32 = vector.broadcast %cst_78 : f32 to vector<1x1x1x16xf32>
    %33 = arith.mulf %31, %32 : vector<1x1x1x16xf32>
    %c0_79 = arith.constant 0 : index
    %c0_80 = arith.constant 0 : index
    %c0_81 = arith.constant 0 : index
    %c16_82 = arith.constant 16 : index
    %34 = vector.load %arg8[%c0_79, %c0_80, %c0_81, %c16_82] : memref<1x1x1x48xf32, #tpu.memory_space<vmem>>, vector<1x1x1x16xf32>
    %c0_83 = arith.constant 0 : index
    %c0_84 = arith.constant 0 : index
    %c0_85 = arith.constant 0 : index
    %c112 = arith.constant 112 : index
    %35 = vector.load %arg6[%c0_83, %c0_84, %c0_85, %c112] : memref<1x1x1x128xf32, #tpu.memory_space<vmem>>, vector<1x1x1x16xf32>
    tpu.vector_store %arg6[%c0_83, %c0_84, %c0_85, %c112], %33 {strides = array<i32>} : memref<1x1x1x128xf32, #tpu.memory_space<vmem>>, vector<1x1x1x16xf32>,
    %36 = arith.subf %34, %33 : vector<1x1x1x16xf32>
    %c0_86 = arith.constant 0 : index
    %c0_87 = arith.constant 0 : index
    %c0_88 = arith.constant 0 : index
    %c112_89 = arith.constant 112 : index
    %37 = vector.load %arg5[%c0_86, %c0_87, %c0_88, %c112_89] : memref<1x1x1x128xf32, #tpu.memory_space<vmem>>, vector<1x1x1x16xf32>
    tpu.vector_store %arg5[%c0_86, %c0_87, %c0_88, %c112_89], %36 {strides = array<i32>} : memref<1x1x1x128xf32, #tpu.memory_space<vmem>>, vector<1x1x1x16xf32>,
    %c0_90 = arith.constant 0 : index
    %c0_91 = arith.constant 0 : index
    %c0_92 = arith.constant 0 : index
    %c0_93 = arith.constant 0 : index
    %38 = vector.load %arg3[%c0_90, %c0_91, %c0_92, %c0_93] : memref<1x1x1x128xf32, #tpu.memory_space<vmem>>, vector<1x1x1x96xf32>
    %c0_94 = arith.constant 0 : index
    %c0_95 = arith.constant 0 : index
    %c0_96 = arith.constant 0 : index
    %c8_97 = arith.constant 8 : index
    %39 = vector.load %arg3[%c0_94, %c0_95, %c0_96, %c8_97] : memref<1x1x1x128xf32, #tpu.memory_space<vmem>>, vector<1x1x1x96xf32>
    %40 = arith.addf %38, %39 : vector<1x1x1x96xf32>
    %c0_98 = arith.constant 0 : index
    %c0_99 = arith.constant 0 : index
    %c0_100 = arith.constant 0 : index
    %c16_101 = arith.constant 16 : index
    %41 = vector.load %arg3[%c0_98, %c0_99, %c0_100, %c16_101] : memref<1x1x1x128xf32, #tpu.memory_space<vmem>>, vector<1x1x1x96xf32>
    %42 = arith.addf %40, %41 : vector<1x1x1x96xf32>
    %c0_102 = arith.constant 0 : index
    %c0_103 = arith.constant 0 : index
    %c0_104 = arith.constant 0 : index
    %c24_105 = arith.constant 24 : index
    %43 = vector.load %arg3[%c0_102, %c0_103, %c0_104, %c24_105] : memref<1x1x1x128xf32, #tpu.memory_space<vmem>>, vector<1x1x1x96xf32>
    %44 = arith.addf %42, %43 : vector<1x1x1x96xf32>
    %c0_106 = arith.constant 0 : index
    %c0_107 = arith.constant 0 : index
    %c0_108 = arith.constant 0 : index
    %c32_109 = arith.constant 32 : index
    %45 = vector.load %arg3[%c0_106, %c0_107, %c0_108, %c32_109] : memref<1x1x1x128xf32, #tpu.memory_space<vmem>>, vector<1x1x1x96xf32>
    %46 = arith.addf %44, %45 : vector<1x1x1x96xf32>
    %cst_110 = arith.constant 2.000000e-01 : f32
    %47 = vector.broadcast %cst_110 : f32 to vector<1x1x1x96xf32>
    %48 = arith.mulf %46, %47 : vector<1x1x1x96xf32>
    %c0_111 = arith.constant 0 : index
    %c0_112 = arith.constant 0 : index
    %c0_113 = arith.constant 0 : index
    %c16_114 = arith.constant 16 : index
    %49 = vector.load %arg6[%c0_111, %c0_112, %c0_113, %c16_114] : memref<1x1x1x128xf32, #tpu.memory_space<vmem>>, vector<1x1x1x96xf32>
    tpu.vector_store %arg6[%c0_111, %c0_112, %c0_113, %c16_114], %48 {strides = array<i32>} : memref<1x1x1x128xf32, #tpu.memory_space<vmem>>, vector<1x1x1x96xf32>,
    %50 = arith.subf %41, %48 : vector<1x1x1x96xf32>
    %c0_115 = arith.constant 0 : index
    %c0_116 = arith.constant 0 : index
    %c0_117 = arith.constant 0 : index
    %c16_118 = arith.constant 16 : index
    %51 = vector.load %arg5[%c0_115, %c0_116, %c0_117, %c16_118] : memref<1x1x1x128xf32, #tpu.memory_space<vmem>>, vector<1x1x1x96xf32>
    tpu.vector_store %arg5[%c0_115, %c0_116, %c0_117, %c16_118], %50 {strides = array<i32>} : memref<1x1x1x128xf32, #tpu.memory_space<vmem>>, vector<1x1x1x96xf32>,
    return
  }
  func.func @transform_0(%arg0: i32, %arg1: i32) -> (i32, i32, i32, i32) {
    %c0_i32 = arith.constant 0 : i32
    %c0_i32_0 = arith.constant 0 : i32
    %c0_i32_1 = arith.constant 0 : i32
    return %arg0, %arg1, %c0_i32, %c0_i32_0 : i32, i32, i32, i32
  }
  func.func @transform_1(%arg0: i32, %arg1: i32) -> (i32, i32, i32, i32) {
    %c0_i32 = arith.constant 0 : i32
    %c0_i32_0 = arith.constant 0 : i32
    %c0_i32_1 = arith.constant 0 : i32
    return %arg0, %arg1, %c0_i32, %c0_i32_0 : i32, i32, i32, i32
  }
  func.func @transform_2(%arg0: i32, %arg1: i32) -> (i32, i32, i32, i32) {
    %c0_i32 = arith.constant 0 : i32
    %c0_i32_0 = arith.constant 0 : i32
    %c0_i32_1 = arith.constant 0 : i32
    return %arg0, %arg1, %c0_i32, %c0_i32_0 : i32, i32, i32, i32
  }
  func.func @transform_3(%arg0: i32, %arg1: i32) -> (i32, i32, i32, i32) {
    %c0_i32 = arith.constant 0 : i32
    %c0_i32_0 = arith.constant 0 : i32
    %c0_i32_1 = arith.constant 0 : i32
    return %arg0, %arg1, %c0_i32, %c0_i32_0 : i32, i32, i32, i32
  }
  func.func @transform_4(%arg0: i32, %arg1: i32) -> (i32, i32, i32, i32) {
    %c0_i32 = arith.constant 0 : i32
    %c0_i32_0 = arith.constant 0 : i32
    %c0_i32_1 = arith.constant 0 : i32
    return %arg0, %arg1, %c0_i32, %c0_i32_0 : i32, i32, i32, i32
  }
}

</mosaic_0001>

<llo_original>
// kernel: series_decomp.1
$region0: #{series_decomp.1}
  #allocation0 [shape = 'u32[]', space=smem, size = 0x4, offset = 0x4, fixed_abs, tag = 'smem constant byte address 0x4 - core index']
  #allocation1 [shape = 'u32[144,128]{1,0:T(1,128)}', space=vmem, size = 0x12000, scoped, tag = 'internal scratch']
  #allocation2 [shape = 'f32[1,1,1,48]{3,2,1,0:T(1,128)}', space=vmem, size = 0x200, scoped, tag = 'scratch operand']
  #allocation3 [shape = 'f32[1,1,1,48]{3,2,1,0:T(1,128)}', space=vmem, size = 0x200, scoped, tag = 'scratch operand']
  %s0 = inlined_call_operand.vmem [shape: f32[2,1,1,16], index: 0, kind: input, shape index: {}]
  %s1 = inlined_call_operand.vmem [shape: f32[2,1,1,128], index: 1, kind: input, shape index: {}]
  %s2 = inlined_call_operand.vmem [shape: f32[2,1,1,16], index: 2, kind: input, shape index: {}]
  %s3 = inlined_call_operand.vmem [shape: f32[2,1,1,128], index: 3, kind: output, shape index: {0}]
  %s4 = inlined_call_operand.vmem [shape: f32[2,1,1,128], index: 4, kind: output, shape index: {1}]
  %5 = xla_tuple %s3, %s4
  %s6 = sld [smem:[#allocation0]]
  $region53: #{series_decomp.1} parent=0
    _
  %s8 = ssub.s32 1, %s6
  %s9 = scalar_select 0, %s8, %s6
  loop: start=0, step=1, limit=4
  $region2: #{series_decomp.1} parent=0 // loop_pre_header
    _
  $region3: #{series_decomp.1} parent=0 // loop_header
    %s11 = sphi 0, %s15
    %p12 = scmp.ge.s32.totalorder %s11, 4
    %s18 = sphi 0, %s30
    %s19 = sphi 0, %s26
    %s20 = sphi 0, %s18
    %s21 = sphi 0, %s19
    %s22 = sphi 0, %s20
    %s23 = sphi 0, %s21
    %s35 = sphi 0, %s37
    %s38 = sphi 0, %s35
    %s39 = sphi 0, %s38
    %s55 = sphi 0, %s39
    %s63 = sphi 0, %s65
    %s66 = sphi 0, %s63
    %s67 = sphi 0, %s66
    %s83 = sphi 0, %s67
    %s91 = sphi 0, %s93
    %s94 = sphi 0, %s91
    %s95 = sphi 0, %s94
    %s111 = sphi 0, %s95
    %s119 = sphi 0, %s121
    %s122 = sphi 0, %s119
    %s123 = sphi 0, %s122
    %s139 = sphi 0, %s123
    %s147 = sphi 0, %s149
    %s150 = sphi 0, %s147
    %s151 = sphi 0, %s150
    %s167 = sphi 0, %s151
  $region4: #{series_decomp.1} parent=0 // loop_header_branch
    %14 = sbr.rel (%p12) target = $region8
  $region5: #{series_decomp.1} parent=0 // loop_body
    %s16 = ssub.s32 %s11, 1
    %s17 = ssub.s32 %s11, 2
    %s24 = sadd.s32 1, %s19
    %p25 = scmp.ge.s32.totalorder %s24, 1
    %s26 = scalar_select %p25, 0, %s24
    %s27 = sadd.s32 1, %s18
    %s28 = scalar_select %p25, %s27, %s18
    %p29 = scmp.ge.s32.totalorder %s28, 2
    %s30 = scalar_select %p29, 0, %s28
    %s31 = ssub.s32 %s18, %s30
    %s32 = ssub.s32 %s19, %s26
    %s33 = sor.u32 %s31, %s32
    %p34 = scmp.eq.s32.totalorder %s33, 0
    %s36 = sadd.s32 %s35, 1
    %s37 = scalar_select %p34, %s35, %s36
    %p40 = pneg %p34
    %p41 = scmp.eq.s32.totalorder %s11, 1
    %p42 = por %p40, %p41
    %p43 = scmp.ne.s32.totalorder %s35, %s38
    %p44 = scmp.eq.s32.totalorder %s11, 0
    %p45 = por %p43, %p44
    %p46 = scmp.ne.s32.totalorder %s35, %s38
    %p47 = scmp.eq.s32.totalorder %s16, 1
    %p48 = por %p46, %p47
    %p49 = scmp.ne.s32.totalorder %s38, %s39
    %p50 = scmp.eq.s32.totalorder %s16, 0
    %p51 = por %p49, %p50
    %p52 = scmp.ne.s32.totalorder %s38, %s39
    %p53 = scmp.eq.s32.totalorder %s17, 1
    %p54 = por %p52, %p53
    %p56 = scmp.ne.s32.totalorder %s39, %s55
    %p57 = scmp.eq.s32.totalorder %s17, 0
    %p58 = por %p56, %p57
    %s59 = ssub.s32 %s18, %s30
    %s60 = ssub.s32 %s19, %s26
    %s61 = sor.u32 %s59, %s60
    %p62 = scmp.eq.s32.totalorder %s61, 0
    %s64 = sadd.s32 %s63, 1
    %s65 = scalar_select %p62, %s63, %s64
    %p68 = pneg %p62
    %p69 = scmp.eq.s32.totalorder %s11, 1
    %p70 = por %p68, %p69
    %p71 = scmp.ne.s32.totalorder %s63, %s66
    %p72 = scmp.eq.s32.totalorder %s11, 0
    %p73 = por %p71, %p72
    %p74 = scmp.ne.s32.totalorder %s63, %s66
    %p75 = scmp.eq.s32.totalorder %s16, 1
    %p76 = por %p74, %p75
    %p77 = scmp.ne.s32.totalorder %s66, %s67
    %p78 = scmp.eq.s32.totalorder %s16, 0
    %p79 = por %p77, %p78
    %p80 = scmp.ne.s32.totalorder %s66, %s67
    %p81 = scmp.eq.s32.totalorder %s17, 1
    %p82 = por %p80, %p81
    %p84 = scmp.ne.s32.totalorder %s67, %s83
    %p85 = scmp.eq.s32.totalorder %s17, 0
    %p86 = por %p84, %p85
    %s87 = ssub.s32 %s18, %s30
    %s88 = ssub.s32 %s19, %s26
    %s89 = sor.u32 %s87, %s88
    %p90 = scmp.eq.s32.totalorder %s89, 0
    %s92 = sadd.s32 %s91, 1
    %s93 = scalar_select %p90, %s91, %s92
    %p96 = pneg %p90
    %p97 = scmp.eq.s32.totalorder %s11, 1
    %p98 = por %p96, %p97
    %p99 = scmp.ne.s32.totalorder %s91, %s94
    %p100 = scmp.eq.s32.totalorder %s11, 0
    %p101 = por %p99, %p100
    %p102 = scmp.ne.s32.totalorder %s91, %s94
    %p103 = scmp.eq.s32.totalorder %s16, 1
    %p104 = por %p102, %p103
    %p105 = scmp.ne.s32.totalorder %s94, %s95
    %p106 = scmp.eq.s32.totalorder %s16, 0
    %p107 = por %p105, %p106
    %p108 = scmp.ne.s32.totalorder %s94, %s95
    %p109 = scmp.eq.s32.totalorder %s17, 1
    %p110 = por %p108, %p109
    %p112 = scmp.ne.s32.totalorder %s95, %s111
    %p113 = scmp.eq.s32.totalorder %s17, 0
    %p114 = por %p112, %p113
    %s115 = ssub.s32 %s18, %s30
    %s116 = ssub.s32 %s19, %s26
    %s117 = sor.u32 %s115, %s116
    %p118 = scmp.eq.s32.totalorder %s117, 0
    %s120 = sadd.s32 %s119, 1
    %s121 = scalar_select %p118, %s119, %s120
    %p124 = pneg %p118
    %p125 = scmp.eq.s32.totalorder %s11, 1
    %p126 = por %p124, %p125
    %p127 = scmp.ne.s32.totalorder %s119, %s122
    %p128 = scmp.eq.s32.totalorder %s11, 0
    %p129 = por %p127, %p128
    %p130 = scmp.ne.s32.totalorder %s119, %s122
    %p131 = scmp.eq.s32.totalorder %s16, 1
    %p132 = por %p130, %p131
    %p133 = scmp.ne.s32.totalorder %s122, %s123
    %p134 = scmp.eq.s32.totalorder %s16, 0
    %p135 = por %p133, %p134
    %p136 = scmp.ne.s32.totalorder %s122, %s123
    %p137 = scmp.eq.s32.totalorder %s17, 1
    %p138 = por %p136, %p137
    %p140 = scmp.ne.s32.totalorder %s123, %s139
    %p141 = scmp.eq.s32.totalorder %s17, 0
    %p142 = por %p140, %p141
    %s143 = ssub.s32 %s18, %s30
    %s144 = ssub.s32 %s19, %s26
    %s145 = sor.u32 %s143, %s144
    %p146 = scmp.eq.s32.totalorder %s145, 0
    %s148 = sadd.s32 %s147, 1
    %s149 = scalar_select %p146, %s147, %s148
    %p152 = pneg %p146
    %p153 = scmp.eq.s32.totalorder %s11, 1
    %p154 = por %p152, %p153
    %p155 = scmp.ne.s32.totalorder %s147, %s150
    %p156 = scmp.eq.s32.totalorder %s11, 0
    %p157 = por %p155, %p156
    %p158 = scmp.ne.s32.totalorder %s147, %s150
    %p159 = scmp.eq.s32.totalorder %s16, 1
    %p160 = por %p158, %p159
    %p161 = scmp.ne.s32.totalorder %s150, %s151
    %p162 = scmp.eq.s32.totalorder %s16, 0
    %p163 = por %p161, %p162
    %p164 = scmp.ne.s32.totalorder %s150, %s151
    %p165 = scmp.eq.s32.totalorder %s17, 1
    %p166 = por %p164, %p165
    %p168 = scmp.ne.s32.totalorder %s151, %s167
    %p169 = scmp.eq.s32.totalorder %s17, 0
    %p170 = por %p168, %p169
    %p171 = scmp.le.s32.totalorder 1, %s11
    %p172 = scmp.lt.s32.totalorder %s11, 3
    %p173 = pnand %p171, %p172
    %p174 = pneg %p173
    // Predicated region
    $region9: #{series_decomp.1} parent=5 // pred_check
      _
    $region10: #{series_decomp.1} parent=5 // pred_check_branch
      %176 = sbr.rel (%p173) target = $region12
    $region11: #{series_decomp.1} parent=5 // pred_region
      %s177 = ssub.s32 %s11, 1
    $region12: #{series_decomp.1} parent=5 // pred_fallthru
      _
    %p178 = scmp.lt.s32.totalorder %s11, 2
    // Predicated region
    $region13: #{series_decomp.1} parent=5 // pred_check
      %p179 = pneg %p178
    $region14: #{series_decomp.1} parent=5 // pred_check_branch
      %181 = sbr.rel (%p179) target = $region16
    $region15: #{series_decomp.1} parent=5 // pred_region
      // Predicated region
      $region17: #{series_decomp.1} parent=15 // pred_check
        %p182 = pneg %p45
      $region18: #{series_decomp.1} parent=15 // pred_check_branch
        %184 = sbr.rel (%p182) target = $region20
      $region19: #{series_decomp.1} parent=15 // pred_region
        %p185 = scmp.lt.s32.totalorder %s18, 1
        %s186 = scalar_select %p185, %s18, 1
        %p187 = scmp.lt.s32.totalorder %s19, 0
        %s188 = scalar_select %p187, %s19, 0
        %s189 = sadd.s32 %s188, %s186
        %s190 = scalar_lea.vmem %s0, %s189
      $region20: #{series_decomp.1} parent=15 // pred_fallthru
        _
      // Predicated region
      $region21: #{series_decomp.1} parent=15 // pred_check
        %p191 = pneg %p73
      $region22: #{series_decomp.1} parent=15 // pred_check_branch
        %193 = sbr.rel (%p191) target = $region24
      $region23: #{series_decomp.1} parent=15 // pred_region
        %p194 = scmp.lt.s32.totalorder %s18, 1
        %s195 = scalar_select %p194, %s18, 1
        %p196 = scmp.lt.s32.totalorder %s19, 0
        %s197 = scalar_select %p196, %s19, 0
        %s198 = sadd.s32 %s197, %s195
        %s199 = scalar_lea.vmem %s1, %s198
      $region24: #{series_decomp.1} parent=15 // pred_fallthru
        _
      // Predicated region
      $region25: #{series_decomp.1} parent=15 // pred_check
        %p200 = pneg %p101
      $region26: #{series_decomp.1} parent=15 // pred_check_branch
        %202 = sbr.rel (%p200) target = $region28
      $region27: #{series_decomp.1} parent=15 // pred_region
        %p203 = scmp.lt.s32.totalorder %s18, 1
        %s204 = scalar_select %p203, %s18, 1
        %p205 = scmp.lt.s32.totalorder %s19, 0
        %s206 = scalar_select %p205, %s19, 0
        %s207 = sadd.s32 %s206, %s204
        %s208 = scalar_lea.vmem %s2, %s207
      $region28: #{series_decomp.1} parent=15 // pred_fallthru
        _
    $region16: #{series_decomp.1} parent=5 // pred_fallthru
      _
    %p209 = scmp.le.s32.totalorder 1, %s11
    %p210 = scmp.lt.s32.totalorder %s11, 3
    %p211 = pnand %p209, %p210
    %p212 = pneg %p211
    // Predicated region
    $region29: #{series_decomp.1} parent=5 // pred_check
      _
    $region30: #{series_decomp.1} parent=5 // pred_check_branch
      %214 = sbr.rel (%p211) target = $region32
    $region31: #{series_decomp.1} parent=5 // pred_region
      %s215 = ssub.s32 %s11, 1
      %p216 = scmp.lt.s32.totalorder %s20, 1
      %s217 = scalar_select %p216, %s20, 1
      %p218 = scmp.lt.s32.totalorder %s21, 0
      %s219 = scalar_select %p218, %s21, 0
      %s220 = sadd.s32 %s219, %s217
      %s221 = scalar_lea.vmem %s0, %s220
      %p222 = pneg %p51
      %p223 = pneg %p48
      %p224 = scmp.lt.s32.totalorder %s20, 1
      %s225 = scalar_select %p224, %s20, 1
      %p226 = scmp.lt.s32.totalorder %s21, 0
      %s227 = scalar_select %p226, %s21, 0
      %s228 = sadd.s32 %s227, %s225
      %s229 = scalar_lea.vmem %s1, %s228
      %p230 = pneg %p79
      %p231 = pneg %p76
      %p232 = scmp.lt.s32.totalorder %s20, 1
      %s233 = scalar_select %p232, %s20, 1
      %p234 = scmp.lt.s32.totalorder %s21, 0
      %s235 = scalar_select %p234, %s21, 0
      %s236 = sadd.s32 %s235, %s233
      %s237 = scalar_lea.vmem %s2, %s236
      %p238 = pneg %p107
      %p239 = pneg %p104
      %p240 = pneg %p135
      %p241 = pneg %p132
      %p242 = scmp.lt.s32.totalorder %s20, 1
      %s243 = scalar_select %p242, %s20, 1
      %p244 = scmp.lt.s32.totalorder %s21, 0
      %s245 = scalar_select %p244, %s21, 0
      %s246 = sadd.s32 %s245, %s243
      %s247 = scalar_lea.vmem %s3, %s246
      %p248 = pneg %p163
      %p249 = pneg %p160
      %p250 = scmp.lt.s32.totalorder %s20, 1
      %s251 = scalar_select %p250, %s20, 1
      %p252 = scmp.lt.s32.totalorder %s21, 0
      %s253 = scalar_select %p252, %s21, 0
      %s254 = sadd.s32 %s253, %s251
      %s255 = scalar_lea.vmem %s4, %s254
      %p256 = scmp.lt.s32.totalorder %s20, 1
      %s257 = scalar_select %p256, %s20, 1
      %p258 = scmp.lt.s32.totalorder %s21, 0
      %s259 = scalar_select %p258, %s21, 0
      %s260 = sadd.s32 %s259, %s257
      %s261 = scalar_lea.vmem %s0, %s260
      %p262 = scmp.lt.s32.totalorder %s20, 1
      %s263 = scalar_select %p262, %s20, 1
      %p264 = scmp.lt.s32.totalorder %s21, 0
      %s265 = scalar_select %p264, %s21, 0
      %s266 = sadd.s32 %s265, %s263
      %s267 = scalar_lea.vmem %s1, %s266
      %p268 = scmp.lt.s32.totalorder %s20, 1
      %s269 = scalar_select %p268, %s20, 1
      %p270 = scmp.lt.s32.totalorder %s21, 0
      %s271 = scalar_select %p270, %s21, 0
      %s272 = sadd.s32 %s271, %s269
      %s273 = scalar_lea.vmem %s2, %s272
      %p274 = scmp.lt.s32.totalorder %s20, 1
      %s275 = scalar_select %p274, %s20, 1
      %p276 = scmp.lt.s32.totalorder %s21, 0
      %s277 = scalar_select %p276, %s21, 0
      %s278 = sadd.s32 %s277, %s275
      %s279 = scalar_lea.vmem %s3, %s278
      %p280 = scmp.lt.s32.totalorder %s20, 1
      %s281 = scalar_select %p280, %s20, 1
      %p282 = scmp.lt.s32.totalorder %s21, 0
      %s283 = scalar_select %p282, %s21, 0
      %s284 = sadd.s32 %s283, %s281
      %s285 = scalar_lea.vmem %s4, %s284
      %v286 = vld [vmem:[%s261] sm:$0x1]
      %vm287 = vcmask 122880
      %288 = vst.msk [vmem:[#allocation2] sm:$0x1] %vm287, %v286
      %v289 = vld [vmem:[%s267] sm:$0x1]
      %v291 = vlaneseq
      %v292 = vshrl.u32 %v291, 7
      %v293 = vsub.s32 0, %v292
      %v294 = vrot.slane %v289, %v293
      %295 = vrot.lane.b32.xlu0 %v294, 16
      %v296 = vpop.permute.xlu0 %295
      %vm298 = vcmask 385152
      %299 = vst.msk [vmem:[#allocation2] sm:$0x1] %vm298, %v296
      %v300 = vld [vmem:[%s267] sm:$0x1]
      %v302 = vlaneseq
      %v303 = vshrl.u32 %v302, 7
      %v304 = vsub.s32 0, %v303
      %v305 = vrot.slane %v300, %v304
      %306 = vrot.lane.b32.xlu0 %v305, 32
      %v307 = vpop.permute.xlu0 %306
      %vm309 = vcmask 253952
      %310 = vst.msk [vmem:[#allocation3] sm:$0x1] %vm309, %v307
      %v311 = vld [vmem:[%s273] sm:$0x1]
      %v313 = vlaneseq
      %v314 = vshrl.u32 %v313, 7
      %v315 = vsub.s32 0, %v314
      %v316 = vrot.slane %v311, %v315
      %317 = vrot.lane.b32.xlu0 %v316, 32
      %v318 = vpop.permute.xlu0 %317
      %vm320 = vcmask 385280
      %321 = vst.msk [vmem:[#allocation3] sm:$0x1] %vm320, %v318
      %v322 = vld [vmem:[#allocation2] sm:$0x1]
      %324 = vrot.lane.b32.xlu0 %v322, 120
      %v325 = vpop.permute.xlu0 %324
      %v327 = vadd.f32 %v322, %v325
      %328 = vrot.lane.b32.xlu0 %v322, 112
      %v329 = vpop.permute.xlu0 %328
      %v331 = vadd.f32 %v327, %v329
      %332 = vrot.lane.b32.xlu0 %v322, 104
      %v333 = vpop.permute.xlu0 %332
      %v335 = vadd.f32 %v331, %v333
      %336 = vrot.lane.b32.xlu0 %v322, 96
      %v337 = vpop.permute.xlu0 %336
      %v339 = vadd.f32 %v335, %v337
      %v340 = vmul.f32 %v339, 0.2
      %341 = vst.msk [vmem:[%s285] sm:$0x1] %vm287, %v340
      %343 = vrot.lane.b32.xlu0 %v340, 16
      %v344 = vpop.permute.xlu0 %343
      %v346 = vsub.f32 %v322, %v344
      %v348 = vlaneseq
      %v349 = vshrl.u32 %v348, 7
      %v350 = vsub.s32 0, %v349
      %v351 = vrot.slane %v346, %v350
      %352 = vrot.lane.b32.xlu0 %v351, 112
      %v353 = vpop.permute.xlu0 %352
      %355 = vst.msk [vmem:[%s279] sm:$0x1] %vm287, %v353
      %v356 = vld [vmem:[#allocation3] sm:$0x1]
      %358 = vrot.lane.b32.xlu0 %v356, 120
      %v359 = vpop.permute.xlu0 %358
      %v361 = vadd.f32 %v356, %v359
      %362 = vrot.lane.b32.xlu0 %v356, 112
      %v363 = vpop.permute.xlu0 %362
      %v365 = vadd.f32 %v361, %v363
      %366 = vrot.lane.b32.xlu0 %v356, 104
      %v367 = vpop.permute.xlu0 %366
      %v369 = vadd.f32 %v365, %v367
      %370 = vrot.lane.b32.xlu0 %v356, 96
      %v371 = vpop.permute.xlu0 %370
      %v373 = vadd.f32 %v369, %v371
      %v374 = vmul.f32 %v373, 0.2
      %v376 = vlaneseq
      %v377 = vshrl.u32 %v376, 7
      %v378 = vsub.s32 0, %v377
      %v379 = vrot.slane %v374, %v378
      %380 = vrot.lane.b32.xlu0 %v379, 112
      %v381 = vpop.permute.xlu0 %380
      %vm383 = vcmask 1041280
      %384 = vst.msk [vmem:[%s285] sm:$0x1] %vm383, %v381
      %385 = vrot.lane.b32.xlu0 %v374, 16
      %v386 = vpop.permute.xlu0 %385
      %v388 = vsub.f32 %v356, %v386
      %v390 = vlaneseq
      %v391 = vshrl.u32 %v390, 7
      %v392 = vsub.s32 0, %v391
      %v393 = vrot.slane %v388, %v392
      %394 = vrot.lane.b32.xlu0 %v393, 96
      %v395 = vpop.permute.xlu0 %394
      %397 = vst.msk [vmem:[%s279] sm:$0x1] %vm383, %v395
      %v398 = vld [vmem:[%s267] sm:$0x1]
      %400 = vrot.lane.b32.xlu0 %v398, 120
      %v401 = vpop.permute.xlu0 %400
      %v403 = vadd.f32 %v398, %v401
      %404 = vrot.lane.b32.xlu0 %v398, 112
      %v405 = vpop.permute.xlu0 %404
      %v407 = vadd.f32 %v403, %v405
      %408 = vrot.lane.b32.xlu0 %v398, 104
      %v409 = vpop.permute.xlu0 %408
      %v411 = vadd.f32 %v407, %v409
      %412 = vrot.lane.b32.xlu0 %v398, 96
      %v413 = vpop.permute.xlu0 %412
      %v415 = vadd.f32 %v411, %v413
      %v416 = vmul.f32 %v415, 0.2
      %v418 = vlaneseq
      %v419 = vshrl.u32 %v418, 7
      %v420 = vsub.s32 0, %v419
      %v421 = vrot.slane %v416, %v420
      %422 = vrot.lane.b32.xlu0 %v421, 16
      %v423 = vpop.permute.xlu0 %422
      %vm425 = vcmask 909440
      %426 = vst.msk [vmem:[%s285] sm:$0x1] %vm425, %v423
      %427 = vrot.lane.b32.xlu0 %v416, 16
      %v428 = vpop.permute.xlu0 %427
      %v430 = vsub.f32 %v398, %v428
      %431 = vst.msk [vmem:[%s279] sm:$0x1] %vm425, %v430
      %p432 = scmp.lt.s32.totalorder %s20, 1
      %s433 = scalar_select %p432, %s20, 1
      %p434 = scmp.lt.s32.totalorder %s21, 0
      %s435 = scalar_select %p434, %s21, 0
      %s436 = sadd.s32 %s435, %s433
      %s437 = scalar_lea.vmem %s3, %s436
      %p438 = scmp.lt.s32.totalorder %s20, 1
      %s439 = scalar_select %p438, %s20, 1
      %p440 = scmp.lt.s32.totalorder %s21, 0
      %s441 = scalar_select %p440, %s21, 0
      %s442 = sadd.s32 %s441, %s439
      %s443 = scalar_lea.vmem %s4, %s442
      // Predicated region
      $region33: #{series_decomp.1} parent=31 // pred_check
        %p444 = pneg %p132
      $region34: #{series_decomp.1} parent=31 // pred_check_branch
        %446 = sbr.rel (%p444) target = $region36
      $region35: #{series_decomp.1} parent=31 // pred_region
        _
      $region36: #{series_decomp.1} parent=31 // pred_fallthru
        _
      // Predicated region
      $region37: #{series_decomp.1} parent=31 // pred_check
        %p447 = pneg %p160
      $region38: #{series_decomp.1} parent=31 // pred_check_branch
        %449 = sbr.rel (%p447) target = $region40
      $region39: #{series_decomp.1} parent=31 // pred_region
        _
      $region40: #{series_decomp.1} parent=31 // pred_fallthru
        _
    $region32: #{series_decomp.1} parent=5 // pred_fallthru
      _
    %p450 = scmp.le.s32.totalorder 2, %s11
    // Predicated region
    $region41: #{series_decomp.1} parent=5 // pred_check
      %p451 = pneg %p450
    $region42: #{series_decomp.1} parent=5 // pred_check_branch
      %453 = sbr.rel (%p451) target = $region44
    $region43: #{series_decomp.1} parent=5 // pred_region
      %s454 = ssub.s32 %s11, 2
      // Predicated region
      $region45: #{series_decomp.1} parent=43 // pred_check
        %p455 = pneg %p138
      $region46: #{series_decomp.1} parent=43 // pred_check_branch
        %457 = sbr.rel (%p455) target = $region48
      $region47: #{series_decomp.1} parent=43 // pred_region
        %p458 = scmp.lt.s32.totalorder %s22, 1
        %s459 = scalar_select %p458, %s22, 1
        %p460 = scmp.lt.s32.totalorder %s23, 0
        %s461 = scalar_select %p460, %s23, 0
        %s462 = sadd.s32 %s461, %s459
        %s463 = scalar_lea.vmem %s3, %s462
      $region48: #{series_decomp.1} parent=43 // pred_fallthru
        _
      // Predicated region
      $region49: #{series_decomp.1} parent=43 // pred_check
        %p464 = pneg %p166
      $region50: #{series_decomp.1} parent=43 // pred_check_branch
        %466 = sbr.rel (%p464) target = $region52
      $region51: #{series_decomp.1} parent=43 // pred_region
        %p467 = scmp.lt.s32.totalorder %s22, 1
        %s468 = scalar_select %p467, %s22, 1
        %p469 = scmp.lt.s32.totalorder %s23, 0
        %s470 = scalar_select %p469, %s23, 0
        %s471 = sadd.s32 %s470, %s468
        %s472 = scalar_lea.vmem %s4, %s471
      $region52: #{series_decomp.1} parent=43 // pred_fallthru
        _
    $region44: #{series_decomp.1} parent=5 // pred_fallthru
      _
  $region6: #{series_decomp.1} parent=0 // loop_footer
    %s15 = sadd.s32 1, %s11
  $region7: #{series_decomp.1} parent=0 // loop_footer_branch
    %10 = sbr.rel target = $region3
  $region8: #{series_decomp.1} parent=0 // loop_exit
    _

</llo_original>
